<compile_context>
chip_gen: v7x
topology: tpu7x:2x2x1
jax: 0.10.0
libtpu: 0.0.40
codegen_flags: <defaults>
</compile_context>

<pallas_src>
import jax
import jax.numpy as jnp
from jax.experimental import pallas as pl
from jax.experimental.pallas import tpu as pltpu


def _round_up(x, m):
    return (x + m - 1) // m * m


def _actor_critic_kernel(ws_ref, c1_ref, c2_ref,
                         w1a_ref, w1b_ref, w1c_ref, b1_ref,
                         w2_ref, b2_ref,
                         wh_ref, bh_ref,
                         logits_ref, value_ref):
    # Layer 1: split-K over the three obs chunks (== concat([ws,c1,c2]) @ w1).
    h1 = jnp.dot(ws_ref[...], w1a_ref[...], preferred_element_type=jnp.float32)
    h1 += jnp.dot(c1_ref[...], w1b_ref[...], preferred_element_type=jnp.float32)
    h1 += jnp.dot(c2_ref[...], w1c_ref[...], preferred_element_type=jnp.float32)
    h1 = jnp.maximum(h1 + b1_ref[...], 0.0)

    # Layer 2: Linear(H, H) + ReLU.
    h2 = jnp.dot(h1.astype(w2_ref.dtype), w2_ref[...],
                 preferred_element_type=jnp.float32) + b2_ref[...]
    h2 = jnp.maximum(h2, 0.0)

    # Fused policy|value head (width A+1).  Only exact-width results are
    # stored — no lane-padded HBM writeback.  All A+1 columns live in a single
    # 128-lane tile, so the in-register slices below are cheap.
    head = jnp.dot(h2.astype(wh_ref.dtype), wh_ref[...],
                   preferred_element_type=jnp.float32) + bh_ref[...]
    num_actions = logits_ref.shape[-1]
    logits_ref[...] = head[:, :num_actions].astype(logits_ref.dtype)
    value_ref[...] = head[:, num_actions:num_actions + 1].astype(value_ref.dtype)


def actor_critic_forward(obs_dict, params, *, block_b=2048):
    """Pure-JAX wrapper around the Pallas kernel.

    obs_dict: {'which_side': [B,5], 'choice1': [B,5], 'choice2': [B,5]}
    params:   dict with w1,b1,w2,b2,wp,bp,wv,bv (weights stored [in, out]).
    Returns (policy_logits [B, A], state_value [B]).
    """
    ws = obs_dict["which_side"].astype(jnp.float32)
    c1 = obs_dict["choice1"].astype(jnp.float32)
    c2 = obs_dict["choice2"].astype(jnp.float32)
    B = ws.shape[0]
    d_ws, d_c1, d_c2 = ws.shape[1], c1.shape[1], c2.shape[1]

    H = params["w1"].shape[1]
    A = params["wp"].shape[1]
    out_w = A + 1

    # Fused head weight/bias [H, A+1]: policy columns followed by the value column.
    wh = jnp.concatenate([params["wp"], params["wv"]], axis=1)   # [H, A+1]
    bh = jnp.concatenate([params["bp"], params["bv"]], axis=1)   # [1, A+1]

    # Split w1 rows so the kernel consumes ws/c1/c2 directly (no XLA concat of x).
    w1a = params["w1"][:d_ws]
    w1b = params["w1"][d_ws:d_ws + d_c1]
    w1c = params["w1"][d_ws + d_c1:]

    # Batch tiling: multiple of 8 (sublane), capped at ceil(B/2) so the
    # "parallel" batch axis has >= 2 grid steps for v7x megacore when B is big.
    b8 = _round_up(B, 8)
    blk = _round_up(max(min(block_b, pl.cdiv(b8, 2)), 8), 8)
    b_pad = _round_up(B, blk)
    if b_pad != B:
        pad = ((0, b_pad - B), (0, 0))
        ws, c1, c2 = jnp.pad(ws, pad), jnp.pad(c1, pad), jnp.pad(c2, pad)

    grid = (b_pad // blk,)

    def obs_spec(d):
        return pl.BlockSpec((blk, d), lambda i: (i, 0))

    def resident_spec(shape):
        # Constant block index -> one VMEM-resident copy across all grid steps.
        return pl.BlockSpec(shape, lambda i: (0, 0))

    obs_dim = d_ws + d_c1 + d_c2
    flops = 2 * b_pad * (obs_dim * H + H * H + H * out_w)
    bytes_accessed = 4 * (
        b_pad * (obs_dim + out_w)                    # streamed obs + exact-width outputs
        + obs_dim * H + H + H * H + H                # resident layer 1/2 params
        + H * out_w + out_w                          # resident fused head
    )

    logits, value = pl.pallas_call(
        _actor_critic_kernel,
        grid=grid,
        out_shape=(jax.ShapeDtypeStruct((b_pad, A), jnp.float32),
                   jax.ShapeDtypeStruct((b_pad, 1), jnp.float32)),
        in_specs=[
            obs_spec(d_ws), obs_spec(d_c1), obs_spec(d_c2),
            resident_spec((d_ws, H)), resident_spec((d_c1, H)),
            resident_spec((d_c2, H)), resident_spec((1, H)),
            resident_spec((H, H)), resident_spec((1, H)),
            resident_spec((H, out_w)), resident_spec((1, out_w)),
        ],
        out_specs=(pl.BlockSpec((blk, A), lambda i: (i, 0)),
                   pl.BlockSpec((blk, 1), lambda i: (i, 0))),
        compiler_params=pltpu.CompilerParams(
            dimension_semantics=("parallel",),
            vmem_limit_bytes=32 * 1024 * 1024),
        cost_estimate=pl.CostEstimate(
            flops=flops, transcendentals=0, bytes_accessed=bytes_accessed),
    )(ws, c1, c2, w1a, w1b, w1c,
      params["b1"], params["w2"], params["b2"], wh, bh)

    if b_pad != B:
        logits = logits[:B]
        value = value[:B]
    return logits, value[:, 0]


def init_params(key, obs_dim=15, hidden_size=128, total_actions=16):
    """Deterministic synthetic init mimicking nn.Linear default (U[-1/sqrt(fan_in), +])."""
    ks = jax.random.split(key, 8)

    def linear(kw, kb, fan_in, fan_out):
        bound = 1.0 / jnp.sqrt(fan_in)
        # stored as [in, out] so the kernel does x @ W (PyTorch does x @ W.T)
        w = jax.random.uniform(kw, (fan_in, fan_out), jnp.float32, -bound, bound)
        b = jax.random.uniform(kb, (1, fan_out), jnp.float32, -bound, bound)
        return w, b

    w1, b1 = linear(ks[0], ks[1], obs_dim, hidden_size)
    w2, b2 = linear(ks[2], ks[3], hidden_size, hidden_size)
    wp, bp = linear(ks[4], ks[5], hidden_size, total_actions)
    wv, bv = linear(ks[6], ks[7], hidden_size, 1)
    return dict(w1=w1, b1=b1, w2=w2, b2=b2, wp=wp, bp=bp, wv=wv, bv=bv)


if __name__ == "__main__":
    key = jax.random.PRNGKey(0)
    k_obs, k_par = jax.random.split(key)
    k_ws, k_c1, k_c2 = jax.random.split(k_obs, 3)

    B = 8
    total_actions = 16
    hidden_size = 128

    obs_dict = {
        "which_side": jax.random.normal(k_ws, (B, 5), jnp.float32),
        "choice1": jax.random.normal(k_c1, (B, 5), jnp.float32),
        "choice2": jax.random.normal(k_c2, (B, 5), jnp.float32),
    }
    params = init_params(k_par, obs_dim=15, hidden_size=hidden_size,
                         total_actions=total_actions)

    logits, value = actor_critic_forward(obs_dict, params)
    jax.block_until_ready((logits, value))

    # Pure-JAX reference check of the same math.
    x = jnp.concatenate([obs_dict["which_side"], obs_dict["choice1"],
                         obs_dict["choice2"]], axis=1)
    h = jnp.maximum(x @ params["w1"] + params["b1"], 0.0)
    h = jnp.maximum(h @ params["w2"] + params["b2"], 0.0)
    ref_logits = h @ params["wp"] + params["bp"]
    ref_value = (h @ params["wv"] + params["bv"])[:, 0]
    assert logits.shape == (B, total_actions)
    assert value.shape == (B,)
    assert jnp.allclose(logits, ref_logits, atol=1e-4, rtol=1e-4)
    assert jnp.allclose(value, ref_value, atol=1e-4, rtol=1e-4)

    # Also exercise the batch-grid path (B not a multiple of the block, multi-step grid).
    B2 = 300
    k2 = jax.random.PRNGKey(1)
    k2a, k2b, k2c = jax.random.split(k2, 3)
    obs2 = {
        "which_side": jax.random.normal(k2a, (B2, 5), jnp.float32),
        "choice1": jax.random.normal(k2b, (B2, 5), jnp.float32),
        "choice2": jax.random.normal(k2c, (B2, 5), jnp.float32),
    }
    lg2, vl2 = actor_critic_forward(obs2, params, block_b=128)
    jax.block_until_ready((lg2, vl2))
    x2 = jnp.concatenate([obs2["which_side"], obs2["choice1"], obs2["choice2"]], axis=1)
    h2 = jnp.maximum(x2 @ params["w1"] + params["b1"], 0.0)
    h2 = jnp.maximum(h2 @ params["w2"] + params["b2"], 0.0)
    assert lg2.shape == (B2, total_actions) and vl2.shape == (B2,)
    assert jnp.allclose(lg2, h2 @ params["wp"] + params["bp"], atol=1e-4, rtol=1e-4)
    assert jnp.allclose(vl2, (h2 @ params["wv"] + params["bv"])[:, 0], atol=1e-4, rtol=1e-4)

    print("KERNEL_OK")
</pallas_src>

<mosaic_0001>
module attributes {stable_mosaic.version = 11 : i64} {
  func.func @_actor_critic_kernel(%arg0: i32, %arg1: memref<8x5xf32, #tpu.memory_space<vmem>>, %arg2: memref<8x5xf32, #tpu.memory_space<vmem>>, %arg3: memref<8x5xf32, #tpu.memory_space<vmem>>, %arg4: memref<5x128xf32, #tpu.memory_space<vmem>>, %arg5: memref<5x128xf32, #tpu.memory_space<vmem>>, %arg6: memref<5x128xf32, #tpu.memory_space<vmem>>, %arg7: memref<1x128xf32, #tpu.memory_space<vmem>>, %arg8: memref<128x128xf32, #tpu.memory_space<vmem>>, %arg9: memref<1x128xf32, #tpu.memory_space<vmem>>, %arg10: memref<128x17xf32, #tpu.memory_space<vmem>>, %arg11: memref<1x17xf32, #tpu.memory_space<vmem>>, %arg12: memref<8x16xf32, #tpu.memory_space<vmem>>, %arg13: memref<8x1xf32, #tpu.memory_space<vmem>>) attributes {dimension_semantics = [#tpu.dimension_semantics<parallel>], iteration_bounds = array<i64: 1>, scalar_prefetch = 0 : i64, scratch_operands = 0 : i64, tpu.core_type = #tpu.core_type<tc>, window_params = [{transform_indices = @transform_0, window_bounds = array<i64: 8, 5>}, {transform_indices = @transform_1, window_bounds = array<i64: 8, 5>}, {transform_indices = @transform_2, window_bounds = array<i64: 8, 5>}, {pipeline_mode = #tpu.pipeline_mode<synchronous>, transform_indices = @transform_3, window_bounds = array<i64: 5, 128>}, {pipeline_mode = #tpu.pipeline_mode<synchronous>, transform_indices = @transform_4, window_bounds = array<i64: 5, 128>}, {pipeline_mode = #tpu.pipeline_mode<synchronous>, transform_indices = @transform_5, window_bounds = array<i64: 5, 128>}, {pipeline_mode = #tpu.pipeline_mode<synchronous>, transform_indices = @transform_6, window_bounds = array<i64: 1, 128>}, {pipeline_mode = #tpu.pipeline_mode<synchronous>, transform_indices = @transform_7, window_bounds = array<i64: 128, 128>}, {pipeline_mode = #tpu.pipeline_mode<synchronous>, transform_indices = @transform_8, window_bounds = array<i64: 1, 128>}, {pipeline_mode = #tpu.pipeline_mode<synchronous>, transform_indices = @transform_9, window_bounds = array<i64: 128, 17>}, {pipeline_mode = #tpu.pipeline_mode<synchronous>, transform_indices = @transform_10, window_bounds = array<i64: 1, 17>}, {transform_indices = @transform_11, window_bounds = array<i64: 8, 16>}, {transform_indices = @transform_12, window_bounds = array<i64: 8, 1>}]} {
    %c0 = arith.constant 0 : index
    %c0_0 = arith.constant 0 : index
    %0 = vector.load %arg1[%c0, %c0_0] : memref<8x5xf32, #tpu.memory_space<vmem>>, vector<8x5xf32>
    %c0_1 = arith.constant 0 : index
    %c0_2 = arith.constant 0 : index
    %1 = vector.load %arg4[%c0_1, %c0_2] : memref<5x128xf32, #tpu.memory_space<vmem>>, vector<5x128xf32>
    %cst = arith.constant dense<0.000000e+00> : vector<8x128xf32>
    %2 = tpu.matmul %0, %1, %cst {dimension_numbers = #tpu.dot_dimension_numbers<[1], [0], [0], [1], [0, 0, 1, 1], [], []>} : vector<8x5xf32>, vector<5x128xf32>, vector<8x128xf32> -> vector<8x128xf32>
    %c0_3 = arith.constant 0 : index
    %c0_4 = arith.constant 0 : index
    %3 = vector.load %arg2[%c0_3, %c0_4] : memref<8x5xf32, #tpu.memory_space<vmem>>, vector<8x5xf32>
    %c0_5 = arith.constant 0 : index
    %c0_6 = arith.constant 0 : index
    %4 = vector.load %arg5[%c0_5, %c0_6] : memref<5x128xf32, #tpu.memory_space<vmem>>, vector<5x128xf32>
    %cst_7 = arith.constant dense<0.000000e+00> : vector<8x128xf32>
    %5 = tpu.matmul %3, %4, %cst_7 {dimension_numbers = #tpu.dot_dimension_numbers<[1], [0], [0], [1], [0, 0, 1, 1], [], []>} : vector<8x5xf32>, vector<5x128xf32>, vector<8x128xf32> -> vector<8x128xf32>
    %6 = arith.addf %2, %5 : vector<8x128xf32>
    %c0_8 = arith.constant 0 : index
    %c0_9 = arith.constant 0 : index
    %7 = vector.load %arg3[%c0_8, %c0_9] : memref<8x5xf32, #tpu.memory_space<vmem>>, vector<8x5xf32>
    %c0_10 = arith.constant 0 : index
    %c0_11 = arith.constant 0 : index
    %8 = vector.load %arg6[%c0_10, %c0_11] : memref<5x128xf32, #tpu.memory_space<vmem>>, vector<5x128xf32>
    %cst_12 = arith.constant dense<0.000000e+00> : vector<8x128xf32>
    %9 = tpu.matmul %7, %8, %cst_12 {dimension_numbers = #tpu.dot_dimension_numbers<[1], [0], [0], [1], [0, 0, 1, 1], [], []>} : vector<8x5xf32>, vector<5x128xf32>, vector<8x128xf32> -> vector<8x128xf32>
    %10 = arith.addf %6, %9 : vector<8x128xf32>
    %c0_13 = arith.constant 0 : index
    %c0_14 = arith.constant 0 : index
    %11 = vector.load %arg7[%c0_13, %c0_14] : memref<1x128xf32, #tpu.memory_space<vmem>>, vector<1x128xf32>
    %12 = vector.broadcast %11 : vector<1x128xf32> to vector<8x128xf32>
    %13 = arith.addf %10, %12 : vector<8x128xf32>
    %cst_15 = arith.constant 0.000000e+00 : f32
    %14 = vector.broadcast %cst_15 : f32 to vector<8x128xf32>
    %15 = arith.maximumf %13, %14 : vector<8x128xf32>
    %c0_16 = arith.constant 0 : index
    %c0_17 = arith.constant 0 : index
    %16 = vector.load %arg8[%c0_16, %c0_17] : memref<128x128xf32, #tpu.memory_space<vmem>>, vector<128x128xf32>
    %cst_18 = arith.constant dense<0.000000e+00> : vector<8x128xf32>
    %17 = tpu.matmul %15, %16, %cst_18 {dimension_numbers = #tpu.dot_dimension_numbers<[1], [0], [0], [1], [0, 0, 1, 1], [], []>} : vector<8x128xf32>, vector<128x128xf32>, vector<8x128xf32> -> vector<8x128xf32>
    %c0_19 = arith.constant 0 : index
    %c0_20 = arith.constant 0 : index
    %18 = vector.load %arg9[%c0_19, %c0_20] : memref<1x128xf32, #tpu.memory_space<vmem>>, vector<1x128xf32>
    %19 = vector.broadcast %18 : vector<1x128xf32> to vector<8x128xf32>
    %20 = arith.addf %17, %19 : vector<8x128xf32>
    %cst_21 = arith.constant 0.000000e+00 : f32
    %21 = vector.broadcast %cst_21 : f32 to vector<8x128xf32>
    %22 = arith.maximumf %20, %21 : vector<8x128xf32>
    %c0_22 = arith.constant 0 : index
    %c0_23 = arith.constant 0 : index
    %23 = vector.load %arg10[%c0_22, %c0_23] : memref<128x17xf32, #tpu.memory_space<vmem>>, vector<128x17xf32>
    %cst_24 = arith.constant dense<0.000000e+00> : vector<8x17xf32>
    %24 = tpu.matmul %22, %23, %cst_24 {dimension_numbers = #tpu.dot_dimension_numbers<[1], [0], [0], [1], [0, 0, 1, 1], [], []>} : vector<8x128xf32>, vector<128x17xf32>, vector<8x17xf32> -> vector<8x17xf32>
    %c0_25 = arith.constant 0 : index
    %c0_26 = arith.constant 0 : index
    %25 = vector.load %arg11[%c0_25, %c0_26] : memref<1x17xf32, #tpu.memory_space<vmem>>, vector<1x17xf32>
    %26 = vector.broadcast %25 : vector<1x17xf32> to vector<8x17xf32>
    %27 = arith.addf %24, %26 : vector<8x17xf32>
    %28 = vector.extract_strided_slice %27 {offsets = [0, 0], sizes = [8, 16], strides = [1, 1]} : vector<8x17xf32> to vector<8x16xf32>
    %c0_27 = arith.constant 0 : index
    %c0_28 = arith.constant 0 : index
    %29 = vector.load %arg12[%c0_27, %c0_28] : memref<8x16xf32, #tpu.memory_space<vmem>>, vector<8x16xf32>
    tpu.vector_store %arg12[%c0_27, %c0_28], %28 {strides = array<i32>} : memref<8x16xf32, #tpu.memory_space<vmem>>, vector<8x16xf32>,
    %30 = vector.extract_strided_slice %27 {offsets = [0, 16], sizes = [8, 1], strides = [1, 1]} : vector<8x17xf32> to vector<8x1xf32>
    %c0_29 = arith.constant 0 : index
    %c0_30 = arith.constant 0 : index
    %31 = vector.load %arg13[%c0_29, %c0_30] : memref<8x1xf32, #tpu.memory_space<vmem>>, vector<8x1xf32>
    tpu.vector_store %arg13[%c0_29, %c0_30], %30 {strides = array<i32>} : memref<8x1xf32, #tpu.memory_space<vmem>>, vector<8x1xf32>,
    return
  }
  func.func @transform_0(%arg0: i32) -> (i32, i32) {
    %c0_i32 = arith.constant 0 : i32
    %c0_i32_0 = arith.constant 0 : i32
    return %arg0, %c0_i32 : i32, i32
  }
  func.func @transform_1(%arg0: i32) -> (i32, i32) {
    %c0_i32 = arith.constant 0 : i32
    %c0_i32_0 = arith.constant 0 : i32
    return %arg0, %c0_i32 : i32, i32
  }
  func.func @transform_2(%arg0: i32) -> (i32, i32) {
    %c0_i32 = arith.constant 0 : i32
    %c0_i32_0 = arith.constant 0 : i32
    return %arg0, %c0_i32 : i32, i32
  }
  func.func @transform_3(%arg0: i32) -> (i32, i32) {
    %c0_i32 = arith.constant 0 : i32
    %c0_i32_0 = arith.constant 0 : i32
    %c0_i32_1 = arith.constant 0 : i32
    return %c0_i32, %c0_i32_0 : i32, i32
  }
  func.func @transform_4(%arg0: i32) -> (i32, i32) {
    %c0_i32 = arith.constant 0 : i32
    %c0_i32_0 = arith.constant 0 : i32
    %c0_i32_1 = arith.constant 0 : i32
    return %c0_i32, %c0_i32_0 : i32, i32
  }
  func.func @transform_5(%arg0: i32) -> (i32, i32) {
    %c0_i32 = arith.constant 0 : i32
    %c0_i32_0 = arith.constant 0 : i32
    %c0_i32_1 = arith.constant 0 : i32
    return %c0_i32, %c0_i32_0 : i32, i32
  }
  func.func @transform_6(%arg0: i32) -> (i32, i32) {
    %c0_i32 = arith.constant 0 : i32
    %c0_i32_0 = arith.constant 0 : i32
    %c0_i32_1 = arith.constant 0 : i32
    return %c0_i32, %c0_i32_0 : i32, i32
  }
  func.func @transform_7(%arg0: i32) -> (i32, i32) {
    %c0_i32 = arith.constant 0 : i32
    %c0_i32_0 = arith.constant 0 : i32
    %c0_i32_1 = arith.constant 0 : i32
    return %c0_i32, %c0_i32_0 : i32, i32
  }
  func.func @transform_8(%arg0: i32) -> (i32, i32) {
    %c0_i32 = arith.constant 0 : i32
    %c0_i32_0 = arith.constant 0 : i32
    %c0_i32_1 = arith.constant 0 : i32
    return %c0_i32, %c0_i32_0 : i32, i32
  }
  func.func @transform_9(%arg0: i32) -> (i32, i32) {
    %c0_i32 = arith.constant 0 : i32
    %c0_i32_0 = arith.constant 0 : i32
    %c0_i32_1 = arith.constant 0 : i32
    return %c0_i32, %c0_i32_0 : i32, i32
  }
  func.func @transform_10(%arg0: i32) -> (i32, i32) {
    %c0_i32 = arith.constant 0 : i32
    %c0_i32_0 = arith.constant 0 : i32
    %c0_i32_1 = arith.constant 0 : i32
    return %c0_i32, %c0_i32_0 : i32, i32
  }
  func.func @transform_11(%arg0: i32) -> (i32, i32) {
    %c0_i32 = arith.constant 0 : i32
    %c0_i32_0 = arith.constant 0 : i32
    return %arg0, %c0_i32 : i32, i32
  }
  func.func @transform_12(%arg0: i32) -> (i32, i32) {
    %c0_i32 = arith.constant 0 : i32
    %c0_i32_0 = arith.constant 0 : i32
    return %arg0, %c0_i32 : i32, i32
  }
}

</mosaic_0001>

<llo_original>
// kernel: tpu_custom_call.1
$region0: #{tpu_custom_call.1}
  #allocation0 [shape = 'u32[]', space=smem, size = 0x4, offset = 0x4, fixed_abs, tag = 'smem constant byte address 0x4 - core index']
  #allocation1 [shape = 'u32[144,128]{1,0:T(1,128)}', space=vmem, size = 0x12000, scoped, tag = 'internal scratch']
  %s0 = inlined_call_operand.vmem [shape: f32[8,5], index: 0, kind: input, shape index: {}]
  %s1 = inlined_call_operand.vmem [shape: f32[8,5], index: 1, kind: input, shape index: {}]
  %s2 = inlined_call_operand.vmem [shape: f32[8,5], index: 2, kind: input, shape index: {}]
  %s3 = inlined_call_operand.vmem [shape: f32[5,128], index: 3, kind: input, shape index: {}]
  %s4 = inlined_call_operand.hbm [shape: f32[5,128], index: 4, kind: input, shape index: {}]
  %s5 = inlined_call_operand.hbm [shape: f32[5,128], index: 5, kind: input, shape index: {}]
  %s6 = inlined_call_operand.vmem [shape: f32[1,128], index: 6, kind: input, shape index: {}]
  %s7 = inlined_call_operand.vmem [shape: f32[128,128], index: 7, kind: input, shape index: {}]
  %s8 = inlined_call_operand.vmem [shape: f32[1,128], index: 8, kind: input, shape index: {}]
  %s9 = inlined_call_operand.vmem [shape: f32[128,17], index: 9, kind: input, shape index: {}]
  %s10 = inlined_call_operand.vmem [shape: f32[1,17], index: 10, kind: input, shape index: {}]
  %s11 = inlined_call_operand.hbm [shape: f32[8,16], index: 11, kind: output, shape index: {0}]
  %s12 = inlined_call_operand.vmem [shape: f32[8,1], index: 12, kind: output, shape index: {1}]
  %13 = xla_tuple %s11, %s12
  %s14 = sld [smem:[#allocation0]]
  $region70: #{tpu_custom_call.1} parent=0
    _
  %s16 = ssub.s32 1, %s14
  %s17 = scalar_select 0, %s16, %s14
  $region1: #{tpu_custom_call.1} parent=0
    #allocation2 [shape = 'u8[4096]{0}', space=vmem, size = 0x1000, scoped, tag = 'input window, operand 4, single buffered']
    #allocation3 [shape = 's32[1]{0}', space=sflag, size = 0x4, scoped, tag = 'scoped memory for tpu_custom_call.1']
    #allocation4 [shape = 's32[1]{0}', space=sflag, size = 0x4, scoped, tag = 'scoped memory for tpu_custom_call.1']
    #allocation5 [shape = 'u8[4096]{0}', space=vmem, size = 0x1000, scoped, tag = 'input window, operand 5, single buffered']
    #allocation6 [shape = 's32[1]{0}', space=sflag, size = 0x4, scoped, tag = 'scoped memory for tpu_custom_call.1']
    #allocation7 [shape = 'u8[4096]{0}', space=vmem, size = 0x1000, scoped, tag = 'output window, operand 0, single buffered']
    %18 = vsyncpa [#allocation3], 0
    %19 = vsyncpa [#allocation6], 0
    %20 = vsyncpa [#allocation4], 0
    // Predicated region
    $region2: #{tpu_custom_call.1} parent=1 // pred_check
      _
    $region3: #{tpu_custom_call.1} parent=1 // pred_check_branch
      %22 = sbr.rel (0) target = $region5
    $region4: #{tpu_custom_call.1} parent=1 // pred_region
      _
    $region5: #{tpu_custom_call.1} parent=1 // pred_fallthru
      _
    // Predicated region
    $region6: #{tpu_custom_call.1} parent=1 // pred_check
      _
    $region7: #{tpu_custom_call.1} parent=1 // pred_check_branch
      %24 = sbr.rel (0) target = $region9
    $region8: #{tpu_custom_call.1} parent=1 // pred_region
      _
    $region9: #{tpu_custom_call.1} parent=1 // pred_fallthru
      _
    // Predicated region
    $region10: #{tpu_custom_call.1} parent=1 // pred_check
      _
    $region11: #{tpu_custom_call.1} parent=1 // pred_check_branch
      %26 = sbr.rel (0) target = $region13
    $region12: #{tpu_custom_call.1} parent=1 // pred_region
      _
    $region13: #{tpu_custom_call.1} parent=1 // pred_fallthru
      _
    // Predicated region
    $region14: #{tpu_custom_call.1} parent=1 // pred_check
      _
    $region15: #{tpu_custom_call.1} parent=1 // pred_check_branch
      %28 = sbr.rel (0) target = $region17
    $region16: #{tpu_custom_call.1} parent=1 // pred_region
      _
    $region17: #{tpu_custom_call.1} parent=1 // pred_fallthru
      _
    // Predicated region
    $region18: #{tpu_custom_call.1} parent=1 // pred_check
      _
    $region19: #{tpu_custom_call.1} parent=1 // pred_check_branch
      %30 = sbr.rel (0) target = $region21
    $region20: #{tpu_custom_call.1} parent=1 // pred_region
      %s32 = ssub.s32 128, 128
      %33 = vsyncadd [#allocation3], %s32
      %s35 = sshll.u32 [#allocation2], 4
      %s36 = int_to_ptr.vmem [resolvable:$true] %s35
      %38 = dma.hbm_to_vmem [thread:$0]  %s4, 128, %s36, [#allocation3]
    $region21: #{tpu_custom_call.1} parent=1 // pred_fallthru
      _
    // Predicated region
    $region22: #{tpu_custom_call.1} parent=1 // pred_check
      _
    $region23: #{tpu_custom_call.1} parent=1 // pred_check_branch
      %40 = sbr.rel (0) target = $region25
    $region24: #{tpu_custom_call.1} parent=1 // pred_region
      %s42 = ssub.s32 128, 128
      %43 = vsyncadd [#allocation6], %s42
      %s45 = sshll.u32 [#allocation5], 4
      %s46 = int_to_ptr.vmem [resolvable:$true] %s45
      %48 = dma.hbm_to_vmem [thread:$0]  %s5, 128, %s46, [#allocation6]
    $region25: #{tpu_custom_call.1} parent=1 // pred_fallthru
      _
    // Predicated region
    $region26: #{tpu_custom_call.1} parent=1 // pred_check
      _
    $region27: #{tpu_custom_call.1} parent=1 // pred_check_branch
      %50 = sbr.rel (0) target = $region29
    $region28: #{tpu_custom_call.1} parent=1 // pred_region
      _
    $region29: #{tpu_custom_call.1} parent=1 // pred_fallthru
      _
    // Predicated region
    $region30: #{tpu_custom_call.1} parent=1 // pred_check
      _
    $region31: #{tpu_custom_call.1} parent=1 // pred_check_branch
      %52 = sbr.rel (0) target = $region33
    $region32: #{tpu_custom_call.1} parent=1 // pred_region
      _
    $region33: #{tpu_custom_call.1} parent=1 // pred_fallthru
      _
    // Predicated region
    $region34: #{tpu_custom_call.1} parent=1 // pred_check
      _
    $region35: #{tpu_custom_call.1} parent=1 // pred_check_branch
      %54 = sbr.rel (0) target = $region37
    $region36: #{tpu_custom_call.1} parent=1 // pred_region
      _
    $region37: #{tpu_custom_call.1} parent=1 // pred_fallthru
      _
    // Predicated region
    $region38: #{tpu_custom_call.1} parent=1 // pred_check
      _
    $region39: #{tpu_custom_call.1} parent=1 // pred_check_branch
      %56 = sbr.rel (0) target = $region41
    $region40: #{tpu_custom_call.1} parent=1 // pred_region
      _
    $region41: #{tpu_custom_call.1} parent=1 // pred_fallthru
      _
    // Predicated region
    $region42: #{tpu_custom_call.1} parent=1 // pred_check
      _
    $region43: #{tpu_custom_call.1} parent=1 // pred_check_branch
      %58 = sbr.rel (0) target = $region45
    $region44: #{tpu_custom_call.1} parent=1 // pred_region
      _
    $region45: #{tpu_custom_call.1} parent=1 // pred_fallthru
      _
    // Predicated region
    $region46: #{tpu_custom_call.1} parent=1 // pred_check
      _
    $region47: #{tpu_custom_call.1} parent=1 // pred_check_branch
      %60 = sbr.rel (0) target = $region49
    $region48: #{tpu_custom_call.1} parent=1 // pred_region
      %61 = dma.done [#allocation3], 128
    $region49: #{tpu_custom_call.1} parent=1 // pred_fallthru
      _
    // Predicated region
    $region50: #{tpu_custom_call.1} parent=1 // pred_check
      _
    $region51: #{tpu_custom_call.1} parent=1 // pred_check_branch
      %63 = sbr.rel (0) target = $region53
    $region52: #{tpu_custom_call.1} parent=1 // pred_region
      %64 = dma.done [#allocation6], 128
    $region53: #{tpu_custom_call.1} parent=1 // pred_fallthru
      _
    %v65 = vld [vmem:[%s0] sm:$0xff]
    %v66 = vld [vmem:[%s3] sm:$0x1f]
    %v67 = vld [vmem:[%s1] sm:$0xff]
    %v68 = vld [vmem:[#allocation2] sm:$0x1f]
    %vm69 = vcmask 39936
    %v71 = vsel %vm69, %v67, 0
    %vm73 = vcmask 1044480
    %v75 = vsel %vm73, %v68, 0
    %77 = vmatprep.subr.mxu0 0.0
    %78 = vmatpush1.msra.mxu0 %v75
    %79 = vmatprep.subr.mxu0 0.0
    %80 = vmatpush1.msra.mxu0 0.0
    %81 = vmatprep.subr.mxu0 0.0
    %82 = vmatpush1.msra.mxu0 0.0
    %83 = vmatprep.subr.mxu0 0.0
    %84 = vmatpush1.msra.mxu0 0.0
    %85 = vmatprep.subr.mxu0 0.0
    %86 = vmatpush1.msra.mxu0 0.0
    %87 = vmatprep.subr.mxu0 0.0
    %88 = vmatpush1.msra.mxu0 0.0
    %89 = vmatprep.subr.mxu0 0.0
    %90 = vmatpush1.msra.mxu0 0.0
    %91 = vmatprep.subr.mxu0 0.0
    %92 = vmatpush1.msra.mxu0 0.0
    %93 = vmatprep.subr.mxu0 0.0
    %94 = vmatpush1.msra.mxu0 0.0
    %95 = vmatprep.subr.mxu0 0.0
    %96 = vmatpush1.msra.mxu0 0.0
    %97 = vmatprep.subr.mxu0 0.0
    %98 = vmatpush1.msra.mxu0 0.0
    %99 = vmatprep.subr.mxu0 0.0
    %100 = vmatpush1.msra.mxu0 0.0
    %101 = vmatprep.subr.mxu0 0.0
    %102 = vmatpush1.msra.mxu0 0.0
    %103 = vmatprep.subr.mxu0 0.0
    %104 = vmatpush1.msra.mxu0 0.0
    %105 = vmatprep.subr.mxu0 0.0
    %106 = vmatpush1.msra.mxu0 0.0
    %107 = vmatprep.subr.mxu0 0.0
    %108 = vmatpush1.msra.mxu0 0.0
    %109 = vmatprep.subr.mxu0 0.0
    %110 = vmatpush1.msra.mxu0 0.0
    %111 = vmatprep.subr.mxu0 0.0
    %112 = vmatpush1.msra.mxu0 0.0
    %113 = vmatprep.subr.mxu0 0.0
    %114 = vmatpush1.msra.mxu0 0.0
    %115 = vmatprep.subr.mxu0 0.0
    %116 = vmatpush1.msra.mxu0 0.0
    %117 = vmatprep.subr.mxu0 0.0
    %118 = vmatpush1.msra.mxu0 0.0
    %119 = vmatprep.subr.mxu0 0.0
    %120 = vmatpush1.msra.mxu0 0.0
    %121 = vmatprep.subr.mxu0 0.0
    %122 = vmatpush1.msra.mxu0 0.0
    %123 = vmatprep.subr.mxu0 0.0
    %124 = vmatpush1.msra.mxu0 0.0
    %125 = vmatprep.subr.mxu0 0.0
    %126 = vmatpush1.msra.mxu0 0.0
    %127 = vmatprep.subr.mxu0 0.0
    %128 = vmatpush1.msra.mxu0 0.0
    %129 = vmatprep.subr.mxu0 0.0
    %130 = vmatpush1.msra.mxu0 0.0
    %131 = vmatprep.subr.mxu0 0.0
    %132 = vmatpush1.msra.mxu0 0.0
    %133 = vmatprep.subr.mxu0 0.0
    %134 = vmatpush1.msra.mxu0 0.0
    %135 = vmatprep.subr.mxu0 0.0
    %136 = vmatpush1.msra.mxu0 0.0
    %137 = vmatprep.subr.mxu0 0.0
    %138 = vmatpush1.msra.mxu0 0.0
    %139 = vmatprep.subr.mxu0 0.0
    %140 = vmatpush1.msra.mxu0 0.0
    %141 = vmatprep.mubr.f32.mxu0 0.0
    %142 = vmatmul.mubr.f32.gmra.mrb[0].mxu0 %v71
    %v143 = vpop.f32.mrb[0].mxu0
    %v144 = vadd.f32 0.0, %v143
    %v145 = vpop.f32.mrb[0].mxu0
    %146 = vdwg.mxu0
    %v148 = vsel %vm69, %v65, 0
    %v151 = vsel %vm73, %v66, 0
    %153 = vmatprep.subr.mxu0 0.0
    %154 = vmatpush1.msra.mxu0 %v151
    %155 = vmatprep.subr.mxu0 0.0
    %156 = vmatpush1.msra.mxu0 0.0
    %157 = vmatprep.subr.mxu0 0.0
    %158 = vmatpush1.msra.mxu0 0.0
    %159 = vmatprep.subr.mxu0 0.0
    %160 = vmatpush1.msra.mxu0 0.0
    %161 = vmatprep.subr.mxu0 0.0
    %162 = vmatpush1.msra.mxu0 0.0
    %163 = vmatprep.subr.mxu0 0.0
    %164 = vmatpush1.msra.mxu0 0.0
    %165 = vmatprep.subr.mxu0 0.0
    %166 = vmatpush1.msra.mxu0 0.0
    %167 = vmatprep.subr.mxu0 0.0
    %168 = vmatpush1.msra.mxu0 0.0
    %169 = vmatprep.subr.mxu0 0.0
    %170 = vmatpush1.msra.mxu0 0.0
    %171 = vmatprep.subr.mxu0 0.0
    %172 = vmatpush1.msra.mxu0 0.0
    %173 = vmatprep.subr.mxu0 0.0
    %174 = vmatpush1.msra.mxu0 0.0
    %175 = vmatprep.subr.mxu0 0.0
    %176 = vmatpush1.msra.mxu0 0.0
    %177 = vmatprep.subr.mxu0 0.0
    %178 = vmatpush1.msra.mxu0 0.0
    %179 = vmatprep.subr.mxu0 0.0
    %180 = vmatpush1.msra.mxu0 0.0
    %181 = vmatprep.subr.mxu0 0.0
    %182 = vmatpush1.msra.mxu0 0.0
    %183 = vmatprep.subr.mxu0 0.0
    %184 = vmatpush1.msra.mxu0 0.0
    %185 = vmatprep.subr.mxu0 0.0
    %186 = vmatpush1.msra.mxu0 0.0
    %187 = vmatprep.subr.mxu0 0.0
    %188 = vmatpush1.msra.mxu0 0.0
    %189 = vmatprep.subr.mxu0 0.0
    %190 = vmatpush1.msra.mxu0 0.0
    %191 = vmatprep.subr.mxu0 0.0
    %192 = vmatpush1.msra.mxu0 0.0
    %193 = vmatprep.subr.mxu0 0.0
    %194 = vmatpush1.msra.mxu0 0.0
    %195 = vmatprep.subr.mxu0 0.0
    %196 = vmatpush1.msra.mxu0 0.0
    %197 = vmatprep.subr.mxu0 0.0
    %198 = vmatpush1.msra.mxu0 0.0
    %199 = vmatprep.subr.mxu0 0.0
    %200 = vmatpush1.msra.mxu0 0.0
    %201 = vmatprep.subr.mxu0 0.0
    %202 = vmatpush1.msra.mxu0 0.0
    %203 = vmatprep.subr.mxu0 0.0
    %204 = vmatpush1.msra.mxu0 0.0
    %205 = vmatprep.subr.mxu0 0.0
    %206 = vmatpush1.msra.mxu0 0.0
    %207 = vmatprep.subr.mxu0 0.0
    %208 = vmatpush1.msra.mxu0 0.0
    %209 = vmatprep.subr.mxu0 0.0
    %210 = vmatpush1.msra.mxu0 0.0
    %211 = vmatprep.subr.mxu0 0.0
    %212 = vmatpush1.msra.mxu0 0.0
    %213 = vmatprep.subr.mxu0 0.0
    %214 = vmatpush1.msra.mxu0 0.0
    %215 = vmatprep.subr.mxu0 0.0
    %216 = vmatpush1.msra.mxu0 0.0
    %217 = vmatprep.mubr.f32.mxu0 0.0
    %218 = vmatmul.mubr.f32.gmra.mrb[0].mxu0 %v148
    %v219 = vpop.f32.mrb[0].mxu0
    %v220 = vadd.f32 %v144, %v219
    %v221 = vpop.f32.mrb[0].mxu0
    %222 = vdwg.mxu0
    %v223 = vld [vmem:[%s2] sm:$0xff]
    %v224 = vld [vmem:[#allocation5] sm:$0x1f]
    %v226 = vsel %vm69, %v223, 0
    %v229 = vsel %vm73, %v224, 0
    %231 = vmatprep.subr.mxu0 0.0
    %232 = vmatpush1.msra.mxu0 %v229
    %233 = vmatprep.subr.mxu0 0.0
    %234 = vmatpush1.msra.mxu0 0.0
    %235 = vmatprep.subr.mxu0 0.0
    %236 = vmatpush1.msra.mxu0 0.0
    %237 = vmatprep.subr.mxu0 0.0
    %238 = vmatpush1.msra.mxu0 0.0
    %239 = vmatprep.subr.mxu0 0.0
    %240 = vmatpush1.msra.mxu0 0.0
    %241 = vmatprep.subr.mxu0 0.0
    %242 = vmatpush1.msra.mxu0 0.0
    %243 = vmatprep.subr.mxu0 0.0
    %244 = vmatpush1.msra.mxu0 0.0
    %245 = vmatprep.subr.mxu0 0.0
    %246 = vmatpush1.msra.mxu0 0.0
    %247 = vmatprep.subr.mxu0 0.0
    %248 = vmatpush1.msra.mxu0 0.0
    %249 = vmatprep.subr.mxu0 0.0
    %250 = vmatpush1.msra.mxu0 0.0
    %251 = vmatprep.subr.mxu0 0.0
    %252 = vmatpush1.msra.mxu0 0.0
    %253 = vmatprep.subr.mxu0 0.0
    %254 = vmatpush1.msra.mxu0 0.0
    %255 = vmatprep.subr.mxu0 0.0
    %256 = vmatpush1.msra.mxu0 0.0
    %257 = vmatprep.subr.mxu0 0.0
    %258 = vmatpush1.msra.mxu0 0.0
    %259 = vmatprep.subr.mxu0 0.0
    %260 = vmatpush1.msra.mxu0 0.0
    %261 = vmatprep.subr.mxu0 0.0
    %262 = vmatpush1.msra.mxu0 0.0
    %263 = vmatprep.subr.mxu0 0.0
    %264 = vmatpush1.msra.mxu0 0.0
    %265 = vmatprep.subr.mxu0 0.0
    %266 = vmatpush1.msra.mxu0 0.0
    %267 = vmatprep.subr.mxu0 0.0
    %268 = vmatpush1.msra.mxu0 0.0
    %269 = vmatprep.subr.mxu0 0.0
    %270 = vmatpush1.msra.mxu0 0.0
    %271 = vmatprep.subr.mxu0 0.0
    %272 = vmatpush1.msra.mxu0 0.0
    %273 = vmatprep.subr.mxu0 0.0
    %274 = vmatpush1.msra.mxu0 0.0
    %275 = vmatprep.subr.mxu0 0.0
    %276 = vmatpush1.msra.mxu0 0.0
    %277 = vmatprep.subr.mxu0 0.0
    %278 = vmatpush1.msra.mxu0 0.0
    %279 = vmatprep.subr.mxu0 0.0
    %280 = vmatpush1.msra.mxu0 0.0
    %281 = vmatprep.subr.mxu0 0.0
    %282 = vmatpush1.msra.mxu0 0.0
    %283 = vmatprep.subr.mxu0 0.0
    %284 = vmatpush1.msra.mxu0 0.0
    %285 = vmatprep.subr.mxu0 0.0
    %286 = vmatpush1.msra.mxu0 0.0
    %287 = vmatprep.subr.mxu0 0.0
    %288 = vmatpush1.msra.mxu0 0.0
    %289 = vmatprep.subr.mxu0 0.0
    %290 = vmatpush1.msra.mxu0 0.0
    %291 = vmatprep.subr.mxu0 0.0
    %292 = vmatpush1.msra.mxu0 0.0
    %293 = vmatprep.subr.mxu0 0.0
    %294 = vmatpush1.msra.mxu0 0.0
    %295 = vmatprep.mubr.f32.mxu0 0.0
    %296 = vmatmul.mubr.f32.gmra.mrb[0].mxu0 %v226
    %v297 = vpop.f32.mrb[0].mxu0
    %v298 = vadd.f32 0.0, %v297
    %v299 = vpop.f32.mrb[0].mxu0
    %300 = vdwg.mxu0
    %v301 = vadd.f32 %v220, %v298
    %v302 = vld [vmem:[%s6] sm:$0x1]
    %v304 = vlaneseq
    %v305 = vshrl.u32 %v304, 7
    %v306 = vsub.s32 0, %v305
    %v307 = vrot.slane %v302, %v306
    %v309 = vadd.f32 %v301, %v307
    %v310 = vmax.f32 %v309, 0.0
    %v311 = vld [vmem:[%s7] sm:$0xff]
    %v312 = vld [vmem:[%s7 + $0x8] sm:$0xff]
    %v313 = vld [vmem:[%s7 + $0x10] sm:$0xff]
    %v314 = vld [vmem:[%s7 + $0x18] sm:$0xff]
    %v315 = vld [vmem:[%s7 + $0x20] sm:$0xff]
    %v316 = vld [vmem:[%s7 + $0x28] sm:$0xff]
    %v317 = vld [vmem:[%s7 + $0x30] sm:$0xff]
    %v318 = vld [vmem:[%s7 + $0x38] sm:$0xff]
    %v319 = vld [vmem:[%s7 + $0x40] sm:$0xff]
    %v320 = vld [vmem:[%s7 + $0x48] sm:$0xff]
    %v321 = vld [vmem:[%s7 + $0x50] sm:$0xff]
    %v322 = vld [vmem:[%s7 + $0x58] sm:$0xff]
    %v323 = vld [vmem:[%s7 + $0x60] sm:$0xff]
    %v324 = vld [vmem:[%s7 + $0x68] sm:$0xff]
    %v325 = vld [vmem:[%s7 + $0x70] sm:$0xff]
    %v326 = vld [vmem:[%s7 + $0x78] sm:$0xff]
    %v327 = vld [vmem:[%s8] sm:$0x1]
    %v329 = vlaneseq
    %v330 = vshrl.u32 %v329, 7
    %v331 = vsub.s32 0, %v330
    %v332 = vrot.slane %v327, %v331
    %334 = vmatprep.subr.mxu0 0.0
    %335 = vmatpush1.msra.mxu0 %v311
    %336 = vmatprep.subr.mxu0 0.0
    %337 = vmatpush1.msra.mxu0 %v312
    %338 = vmatprep.subr.mxu0 0.0
    %339 = vmatpush1.msra.mxu0 %v313
    %340 = vmatprep.subr.mxu0 0.0
    %341 = vmatpush1.msra.mxu0 %v314
    %342 = vmatprep.subr.mxu0 0.0
    %343 = vmatpush1.msra.mxu0 %v315
    %344 = vmatprep.subr.mxu0 0.0
    %345 = vmatpush1.msra.mxu0 %v316
    %346 = vmatprep.subr.mxu0 0.0
    %347 = vmatpush1.msra.mxu0 %v317
    %348 = vmatprep.subr.mxu0 0.0
    %349 = vmatpush1.msra.mxu0 %v318
    %350 = vmatprep.subr.mxu0 0.0
    %351 = vmatpush1.msra.mxu0 %v319
    %352 = vmatprep.subr.mxu0 0.0
    %353 = vmatpush1.msra.mxu0 %v320
    %354 = vmatprep.subr.mxu0 0.0
    %355 = vmatpush1.msra.mxu0 %v321
    %356 = vmatprep.subr.mxu0 0.0
    %357 = vmatpush1.msra.mxu0 %v322
    %358 = vmatprep.subr.mxu0 0.0
    %359 = vmatpush1.msra.mxu0 %v323
    %360 = vmatprep.subr.mxu0 0.0
    %361 = vmatpush1.msra.mxu0 %v324
    %362 = vmatprep.subr.mxu0 0.0
    %363 = vmatpush1.msra.mxu0 %v325
    %364 = vmatprep.subr.mxu0 0.0
    %365 = vmatpush1.msra.mxu0 %v326
    %366 = vmatprep.subr.mxu0 0.0
    %367 = vmatpush1.msra.mxu0 0.0
    %368 = vmatprep.subr.mxu0 0.0
    %369 = vmatpush1.msra.mxu0 0.0
    %370 = vmatprep.subr.mxu0 0.0
    %371 = vmatpush1.msra.mxu0 0.0
    %372 = vmatprep.subr.mxu0 0.0
    %373 = vmatpush1.msra.mxu0 0.0
    %374 = vmatprep.subr.mxu0 0.0
    %375 = vmatpush1.msra.mxu0 0.0
    %376 = vmatprep.subr.mxu0 0.0
    %377 = vmatpush1.msra.mxu0 0.0
    %378 = vmatprep.subr.mxu0 0.0
    %379 = vmatpush1.msra.mxu0 0.0
    %380 = vmatprep.subr.mxu0 0.0
    %381 = vmatpush1.msra.mxu0 0.0
    %382 = vmatprep.subr.mxu0 0.0
    %383 = vmatpush1.msra.mxu0 0.0
    %384 = vmatprep.subr.mxu0 0.0
    %385 = vmatpush1.msra.mxu0 0.0
    %386 = vmatprep.subr.mxu0 0.0
    %387 = vmatpush1.msra.mxu0 0.0
    %388 = vmatprep.subr.mxu0 0.0
    %389 = vmatpush1.msra.mxu0 0.0
    %390 = vmatprep.subr.mxu0 0.0
    %391 = vmatpush1.msra.mxu0 0.0
    %392 = vmatprep.subr.mxu0 0.0
    %393 = vmatpush1.msra.mxu0 0.0
    %394 = vmatprep.subr.mxu0 0.0
    %395 = vmatpush1.msra.mxu0 0.0
    %396 = vmatprep.subr.mxu0 0.0
    %397 = vmatpush1.msra.mxu0 0.0
    %398 = vmatprep.mubr.f32.mxu0 0.0
    %399 = vmatmul.mubr.f32.gmra.mrb[0].mxu0 %v310
    %v400 = vpop.f32.mrb[0].mxu0
    %v401 = vadd.f32 %v332, %v400
    %v402 = vpop.f32.mrb[0].mxu0
    %403 = vdwg.mxu0
    %v404 = vmax.f32 %v401, 0.0
    %v405 = vld [vmem:[%s9] sm:$0xff]
    %v406 = vld [vmem:[%s9 + $0x8] sm:$0xff]
    %v407 = vld [vmem:[%s9 + $0x10] sm:$0xff]
    %v408 = vld [vmem:[%s9 + $0x18] sm:$0xff]
    %v409 = vld [vmem:[%s9 + $0x20] sm:$0xff]
    %v410 = vld [vmem:[%s9 + $0x28] sm:$0xff]
    %v411 = vld [vmem:[%s9 + $0x30] sm:$0xff]
    %v412 = vld [vmem:[%s9 + $0x38] sm:$0xff]
    %v413 = vld [vmem:[%s9 + $0x40] sm:$0xff]
    %v414 = vld [vmem:[%s9 + $0x48] sm:$0xff]
    %v415 = vld [vmem:[%s9 + $0x50] sm:$0xff]
    %v416 = vld [vmem:[%s9 + $0x58] sm:$0xff]
    %v417 = vld [vmem:[%s9 + $0x60] sm:$0xff]
    %v418 = vld [vmem:[%s9 + $0x68] sm:$0xff]
    %v419 = vld [vmem:[%s9 + $0x70] sm:$0xff]
    %v420 = vld [vmem:[%s9 + $0x78] sm:$0xff]
    %v421 = vld [vmem:[%s10] sm:$0x1]
    %v423 = vlaneseq
    %v424 = vshrl.u32 %v423, 7
    %v425 = vsub.s32 0, %v424
    %v426 = vrot.slane %v421, %v425
    %428 = vmatprep.subr.mxu0 0.0
    %429 = vmatpush1.msra.mxu0 %v405
    %430 = vmatprep.subr.mxu0 0.0
    %431 = vmatpush1.msra.mxu0 %v406
    %432 = vmatprep.subr.mxu0 0.0
    %433 = vmatpush1.msra.mxu0 %v407
    %434 = vmatprep.subr.mxu0 0.0
    %435 = vmatpush1.msra.mxu0 %v408
    %436 = vmatprep.subr.mxu0 0.0
    %437 = vmatpush1.msra.mxu0 %v409
    %438 = vmatprep.subr.mxu0 0.0
    %439 = vmatpush1.msra.mxu0 %v410
    %440 = vmatprep.subr.mxu0 0.0
    %441 = vmatpush1.msra.mxu0 %v411
    %442 = vmatprep.subr.mxu0 0.0
    %443 = vmatpush1.msra.mxu0 %v412
    %444 = vmatprep.subr.mxu0 0.0
    %445 = vmatpush1.msra.mxu0 %v413
    %446 = vmatprep.subr.mxu0 0.0
    %447 = vmatpush1.msra.mxu0 %v414
    %448 = vmatprep.subr.mxu0 0.0
    %449 = vmatpush1.msra.mxu0 %v415
    %450 = vmatprep.subr.mxu0 0.0
    %451 = vmatpush1.msra.mxu0 %v416
    %452 = vmatprep.subr.mxu0 0.0
    %453 = vmatpush1.msra.mxu0 %v417
    %454 = vmatprep.subr.mxu0 0.0
    %455 = vmatpush1.msra.mxu0 %v418
    %456 = vmatprep.subr.mxu0 0.0
    %457 = vmatpush1.msra.mxu0 %v419
    %458 = vmatprep.subr.mxu0 0.0
    %459 = vmatpush1.msra.mxu0 %v420
    %460 = vmatprep.subr.mxu0 0.0
    %461 = vmatpush1.msra.mxu0 0.0
    %462 = vmatprep.subr.mxu0 0.0
    %463 = vmatpush1.msra.mxu0 0.0
    %464 = vmatprep.subr.mxu0 0.0
    %465 = vmatpush1.msra.mxu0 0.0
    %466 = vmatprep.subr.mxu0 0.0
    %467 = vmatpush1.msra.mxu0 0.0
    %468 = vmatprep.subr.mxu0 0.0
    %469 = vmatpush1.msra.mxu0 0.0
    %470 = vmatprep.subr.mxu0 0.0
    %471 = vmatpush1.msra.mxu0 0.0
    %472 = vmatprep.subr.mxu0 0.0
    %473 = vmatpush1.msra.mxu0 0.0
    %474 = vmatprep.subr.mxu0 0.0
    %475 = vmatpush1.msra.mxu0 0.0
    %476 = vmatprep.subr.mxu0 0.0
    %477 = vmatpush1.msra.mxu0 0.0
    %478 = vmatprep.subr.mxu0 0.0
    %479 = vmatpush1.msra.mxu0 0.0
    %480 = vmatprep.subr.mxu0 0.0
    %481 = vmatpush1.msra.mxu0 0.0
    %482 = vmatprep.subr.mxu0 0.0
    %483 = vmatpush1.msra.mxu0 0.0
    %484 = vmatprep.subr.mxu0 0.0
    %485 = vmatpush1.msra.mxu0 0.0
    %486 = vmatprep.subr.mxu0 0.0
    %487 = vmatpush1.msra.mxu0 0.0
    %488 = vmatprep.subr.mxu0 0.0
    %489 = vmatpush1.msra.mxu0 0.0
    %490 = vmatprep.subr.mxu0 0.0
    %491 = vmatpush1.msra.mxu0 0.0
    %492 = vmatprep.mubr.f32.mxu0 0.0
    %493 = vmatmul.mubr.f32.gmra.mrb[0].mxu0 %v404
    %v494 = vpop.f32.mrb[0].mxu0
    %v495 = vadd.f32 %v426, %v494
    %v496 = vpop.f32.mrb[0].mxu0
    %497 = vdwg.mxu0
    %vm498 = vcmask 130048
    %499 = vst.msk [vmem:[#allocation7] sm:$0xff] %vm498, %v495
    %501 = vrot.lane.b32.xlu0 %v495, 112
    %v502 = vpop.permute.xlu0 %501
    %vm504 = vcmask 7168
    %505 = vst.msk [vmem:[%s12] sm:$0xff] %vm504, %v502
    // Predicated region
    $region54: #{tpu_custom_call.1} parent=1 // pred_check
      _
    $region55: #{tpu_custom_call.1} parent=1 // pred_check_branch
      %507 = sbr.rel (0) target = $region57
    $region56: #{tpu_custom_call.1} parent=1 // pred_region
      %s509 = ssub.s32 128, 128
      %510 = vsyncadd [#allocation4], %s509
      %s512 = sshll.u32 [#allocation7], 4
      %s513 = int_to_ptr.vmem [resolvable:$true] %s512
      %515 = dma.vmem_to_hbm [thread:$0]  %s513, 128, %s11, [#allocation4]
    $region57: #{tpu_custom_call.1} parent=1 // pred_fallthru
      _
    // Predicated region
    $region58: #{tpu_custom_call.1} parent=1 // pred_check
      _
    $region59: #{tpu_custom_call.1} parent=1 // pred_check_branch
      %517 = sbr.rel (0) target = $region61
    $region60: #{tpu_custom_call.1} parent=1 // pred_region
      _
    $region61: #{tpu_custom_call.1} parent=1 // pred_fallthru
      _
    // Predicated region
    $region62: #{tpu_custom_call.1} parent=1 // pred_check
      _
    $region63: #{tpu_custom_call.1} parent=1 // pred_check_branch
      %519 = sbr.rel (0) target = $region65
    $region64: #{tpu_custom_call.1} parent=1 // pred_region
      %520 = dma.done [#allocation4], 128
    $region65: #{tpu_custom_call.1} parent=1 // pred_fallthru
      _
    // Predicated region
    $region66: #{tpu_custom_call.1} parent=1 // pred_check
      _
    $region67: #{tpu_custom_call.1} parent=1 // pred_check_branch
      %522 = sbr.rel (0) target = $region69
    $region68: #{tpu_custom_call.1} parent=1 // pred_region
      _
    $region69: #{tpu_custom_call.1} parent=1 // pred_fallthru
      _
    %523 = vsyncpa [#allocation3], 1
    %524 = vsyncpa [#allocation6], 1
    %525 = vsyncpa [#allocation4], 1

</llo_original>
